<compile_context>
chip_gen: v6e
topology: v6e:2x2x1
jax: 0.10.0
libtpu: 0.0.40
codegen_flags: <defaults>
</compile_context>

<pallas_src>
import functools

import jax
import jax.numpy as jnp
from jax import lax
from jax.experimental import pallas as pl
from jax.experimental.pallas import tpu as pltpu


_MXU_MIN_GRAPHS = 8                  # switch to the one-hot MXU path once the VPU loop dominates
_MAX_TILE_N = 1024                   # ~86% of HBM roofline in measured sweeps; bounds vreg/VMEM use
_VMEM_BUDGET = 20 * 1024 * 1024      # double-buffered working-set cap; safe on v7x (64 MiB VMEM)


def _round_up(x, m):
    return ((x + m - 1) // m) * m


def _activation(x):                  # TODO(synk): activation registry is cfg-driven; ReLU here.
    return jnp.maximum(x, 0.0)


def _pick_tile_n(n, d, itemsize):
    """Largest sublane-aligned node tile whose double-buffered working set fits the budget."""
    per_row = 4 * d * itemsize + 8               # 2x x-in buffers + 2x out buffers + id column
    tn = max(8, (_VMEM_BUDGET // max(per_row, 1)) // 8 * 8)
    return min(tn, _MAX_TILE_N, _round_up(max(n, 1), 8))


def _static_scalar(v):
    """Concrete scalar value of `v`, or None if it is traced/abstract."""
    try:
        return float(jnp.asarray(v).reshape(-1)[0])
    except Exception:
        return None


# ---------------------------------------------------------------------------
# Pass 1: per-slice partial segment sums -> resident [1, B_pad, D] accumulator.
# ---------------------------------------------------------------------------
def _pool_sum_kernel(x_ref, b_ref, out_ref, *, n, tn, nt_per, b_pad,
                     num_graphs, use_mxu, precision):
    c = pl.program_id(0)                         # core-parallel slice (v7x megacore)
    j = pl.program_id(1)                         # node tile within slice (resident accumulator)

    @pl.when(j == 0)
    def _init():
        out_ref[...] = jnp.zeros_like(out_ref)

    start = (c * nt_per + j) * tn                # un-clamped global row offset of this tile
    row = lax.broadcasted_iota(jnp.int32, (tn, 1), 0)
    valid = (start + row) < n                    # masks tail rows and duplicate (clamped) tiles

    x = x_ref[...]                               # [tn, d], native dtype
    b = b_ref[...]                               # [tn, 1], int32

    if use_mxu:
        # One-hot matmul on the otherwise-idle MXU: O(1) VPU work per element.
        gid = lax.broadcasted_iota(jnp.int32, (tn, b_pad), 1)
        one_hot = ((b == gid) & valid).astype(x.dtype)               # [tn, b_pad], exact 0/1
        x_m = jnp.where(valid, x, jnp.zeros_like(x))                 # keep OOB garbage off the MXU
        partial = lax.dot_general(one_hot, x_m, (((0,), (0,)), ((), ())),
                                  preferred_element_type=jnp.float32,
                                  precision=precision)               # [b_pad, d] f32
    else:
        # Small num_graphs: VPU masked sums, batched into one accumulator RMW per tile.
        xf = x.astype(jnp.float32)
        rows = [jnp.sum(jnp.where((b == g) & valid, xf, 0.0), axis=0, keepdims=True)
                for g in range(num_graphs)]
        if b_pad > num_graphs:
            rows.append(jnp.zeros((b_pad - num_graphs, xf.shape[1]), jnp.float32))
        partial = jnp.concatenate(rows, axis=0)                      # [b_pad, d] f32

    out_ref[...] += partial[None, :, :]


# ---------------------------------------------------------------------------
# Pass 2: out = relu(lamb * x + gamma * pooled[batch]) per node tile.
# ---------------------------------------------------------------------------
def _apply_kernel(lamb_ref, gamma_ref, x_ref, b_ref, pooled_ref, o_ref, *,
                  b_pad, num_graphs, use_mxu, precision):
    lamb = lamb_ref[0]
    gamma = gamma_ref[0]
    x = x_ref[...]                               # [tn, d], native dtype
    b = b_ref[...]                               # [tn, 1], int32

    acc = lamb * x.astype(jnp.float32)           # single full-tile accumulator (bounds vregs)
    if use_mxu:
        gid = lax.broadcasted_iota(jnp.int32, (b.shape[0], b_pad), 1)
        one_hot = (b == gid).astype(jnp.float32)
        gathered = lax.dot_general(one_hot, pooled_ref[...], (((1,), (0,)), ((), ())),
                                   preferred_element_type=jnp.float32,
                                   precision=precision)              # [tn, d]
        acc = acc + gamma * gathered
    else:
        pooled = pooled_ref[...]                 # tiny resident [b_pad, d] table
        for g in range(num_graphs):              # VPU select/FMA gather-back
            acc = acc + jnp.where(b == g, gamma * pooled[g:g + 1, :], 0.0)
    o_ref[...] = _activation(acc).astype(o_ref.dtype)


def _scale_act_kernel(lamb_ref, x_ref, o_ref):
    # gamma statically 0: pooled term vanishes -> plain scale + activation.
    o_ref[...] = _activation(lamb_ref[0] * x_ref[...].astype(jnp.float32)).astype(o_ref.dtype)


# ---------------------------------------------------------------------------
# Wrapper.
# ---------------------------------------------------------------------------
def equivariant_layer(x, batch, lamb, gamma, num_graphs, *, tile_n=None):
    n, d = x.shape
    out_dtype = x.dtype
    itemsize = jnp.dtype(x.dtype).itemsize

    tn = _pick_tile_n(n, d, itemsize)
    if tile_n is not None:
        tn = min(tn, max(8, _round_up(tile_n, 8)))
    n_tiles = pl.cdiv(n, tn)
    b_pad = _round_up(max(num_graphs, 1), 8)
    use_mxu = num_graphs >= _MXU_MIN_GRAPHS
    # One-hot entries are exactly 0/1; DEFAULT MXU precision would round f32 operands to bf16,
    # so keep HIGHEST for f32 inputs (bf16 inputs are already exact under DEFAULT).
    precision = (lax.Precision.HIGHEST if x.dtype == jnp.float32 else lax.Precision.DEFAULT)

    batch_2d = batch.astype(jnp.int32).reshape(n, 1)
    lamb1 = jnp.asarray(lamb, jnp.float32).reshape(1)
    gamma1 = jnp.asarray(gamma, jnp.float32).reshape(1)

    smem = pl.BlockSpec(memory_space=pltpu.MemorySpace.SMEM)
    x_spec_1d = pl.BlockSpec((tn, d), lambda i: (i, 0))
    b_spec_1d = pl.BlockSpec((tn, 1), lambda i: (i, 0))
    cparams = pltpu.CompilerParams(
        dimension_semantics=("parallel",),
        vmem_limit_bytes=32 * 1024 * 1024,
    )

    if _static_scalar(gamma) == 0.0:
        # Trace-time skip of the whole pooling pass when gamma is the untrained init value.
        return pl.pallas_call(
            _scale_act_kernel,
            out_shape=jax.ShapeDtypeStruct((n, d), out_dtype),
            grid=(n_tiles,),
            in_specs=[smem, x_spec_1d],
            out_specs=pl.BlockSpec((tn, d), lambda i: (i, 0)),
            compiler_params=cparams,
        )(lamb1, x)

    # ---- Pass 1: partial segment sums, 2 core-parallel slices x node tiles. ----
    n_slices = 2                               # matches v7x's 2 TensorCores; harmless on 1-TC chips
    nt_per = pl.cdiv(n_tiles, n_slices)

    def tile_idx(c, j):
        # Clamp redundant steps (odd n_tiles) to the last real tile; the in-kernel `valid`
        # mask (computed from the un-clamped offset) zeroes their contribution.
        return jnp.minimum(c * nt_per + j, n_tiles - 1)

    partials = pl.pallas_call(
        functools.partial(_pool_sum_kernel, n=n, tn=tn, nt_per=nt_per, b_pad=b_pad,
                          num_graphs=num_graphs, use_mxu=use_mxu, precision=precision),
        out_shape=jax.ShapeDtypeStruct((n_slices, b_pad, d), jnp.float32),
        grid=(n_slices, nt_per),
        in_specs=[
            pl.BlockSpec((tn, d), lambda c, j: (tile_idx(c, j), 0)),
            pl.BlockSpec((tn, 1), lambda c, j: (tile_idx(c, j), 0)),
        ],
        out_specs=pl.BlockSpec((1, b_pad, d), lambda c, j: (c, 0, 0)),
        compiler_params=pltpu.CompilerParams(
            dimension_semantics=("parallel", "arbitrary"),
            vmem_limit_bytes=32 * 1024 * 1024,
        ),
    )(x, batch_2d)

    # Combine slice partials and mean-normalize: tiny XLA ops on [n_slices, b_pad, d] / [b_pad].
    counts = jax.ops.segment_sum(jnp.ones((n,), jnp.float32), batch_2d[:, 0],
                                 num_segments=b_pad)
    pooled = partials.sum(axis=0) / jnp.maximum(counts, 1.0)[:, None]   # [b_pad, d] f32

    # ---- Pass 2: per-node affine + gather-back + ReLU, parallel over node tiles. ----
    return pl.pallas_call(
        functools.partial(_apply_kernel, b_pad=b_pad, num_graphs=num_graphs,
                          use_mxu=use_mxu, precision=precision),
        out_shape=jax.ShapeDtypeStruct((n, d), out_dtype),
        grid=(n_tiles,),
        in_specs=[
            smem, smem,
            x_spec_1d,
            b_spec_1d,
            pl.BlockSpec((b_pad, d), lambda i: (0, 0)),   # resident pooled table
        ],
        out_specs=pl.BlockSpec((tn, d), lambda i: (i, 0)),
        compiler_params=cparams,
    )(lamb1, gamma1, x, batch_2d, pooled)


# ---------------------------------------------------------------------------
# Pure-JAX reference mirroring the PyTorch forward (mean pool + ReLU).
# ---------------------------------------------------------------------------
def _reference(x, batch, lamb, gamma, num_graphs):
    xf = x.astype(jnp.float32)
    seg = jax.ops.segment_sum(xf, batch, num_segments=num_graphs)
    cnt = jax.ops.segment_sum(jnp.ones((x.shape[0],), jnp.float32), batch,
                              num_segments=num_graphs)
    pooled = seg / jnp.maximum(cnt, 1.0)[:, None]
    lamb = jnp.asarray(lamb, jnp.float32).reshape(())
    gamma = jnp.asarray(gamma, jnp.float32).reshape(())
    return jax.nn.relu(lamb * xf + gamma * pooled[batch])


if __name__ == "__main__":
    key = jax.random.PRNGKey(0)
    ks = jax.random.split(key, 8)

    # --- Test 1: init params (lamb=1, gamma=0) -> pooling pass skipped at trace time. ---
    N, D, B = 8, 32, 2
    x = jax.random.normal(ks[0], (N, D), dtype=jnp.float32)
    batch = jnp.array([0, 0, 0, 0, 1, 1, 1, 1], dtype=jnp.int32)
    out = jax.block_until_ready(
        equivariant_layer(x, batch, jnp.ones((1,)), jnp.zeros((1,)), num_graphs=B))
    ref = _reference(x, batch, 1.0, 0.0, B)
    assert out.shape == (N, D) and out.dtype == x.dtype
    assert jnp.allclose(out, ref, atol=1e-5, rtol=1e-5), "mismatch (gamma=0 fast path)"

    # --- Test 2: nonzero gamma, small num_graphs -> VPU masked path, single tile. ---
    out2 = jax.block_until_ready(
        equivariant_layer(x, batch, jnp.array([0.7]), jnp.array([0.3]), num_graphs=B))
    ref2 = _reference(x, batch, 0.7, 0.3, B)
    assert jnp.allclose(out2, ref2, atol=1e-5, rtol=1e-5), "mismatch (VPU path)"

    # --- Test 3: multi-tile, odd tile count (exercises the clamped 2-slice pass 1), tail mask. ---
    N3, D3, B3 = 1000, 48, 5
    x3 = jax.random.normal(ks[1], (N3, D3), dtype=jnp.float32)
    b3 = jax.random.randint(ks[2], (N3,), 0, B3, dtype=jnp.int32)
    out3 = jax.block_until_ready(
        equivariant_layer(x3, b3, jnp.array([0.9]), jnp.array([0.4]), num_graphs=B3,
                          tile_n=384))
    ref3 = _reference(x3, b3, 0.9, 0.4, B3)
    assert out3.shape == (N3, D3)
    assert jnp.allclose(out3, ref3, atol=1e-4, rtol=1e-4), "mismatch (multi-tile VPU path)"

    # --- Test 4: many graphs -> one-hot MXU path, default (large) tile, f32. ---
    N4, D4, B4 = 3000, 96, 24
    x4 = jax.random.normal(ks[3], (N4, D4), dtype=jnp.float32)
    b4 = jax.random.randint(ks[4], (N4,), 0, B4, dtype=jnp.int32)
    out4 = jax.block_until_ready(
        equivariant_layer(x4, b4, jnp.array([0.8]), jnp.array([0.5]), num_graphs=B4))
    ref4 = _reference(x4, b4, 0.8, 0.5, B4)
    assert jnp.allclose(out4, ref4, atol=1e-3, rtol=1e-3), "mismatch (MXU path, f32)"

    # --- Test 5: bf16 in/out preserved, N not a multiple of 8, MXU path. ---
    N5, D5, B5 = 777, 48, 16
    x5 = jax.random.normal(ks[5], (N5, D5), dtype=jnp.float32).astype(jnp.bfloat16)
    b5 = jax.random.randint(ks[6], (N5,), 0, B5, dtype=jnp.int32)
    out5 = jax.block_until_ready(
        equivariant_layer(x5, b5, jnp.array([0.6]), jnp.array([0.2]), num_graphs=B5))
    ref5 = _reference(x5, b5, 0.6, 0.2, B5)
    assert out5.dtype == jnp.bfloat16
    assert jnp.allclose(out5.astype(jnp.float32), ref5, atol=3e-2, rtol=3e-2), "mismatch (bf16)"

    print("KERNEL_OK")
</pallas_src>

<mosaic_0001>
module attributes {stable_mosaic.version = 11 : i64} {
  func.func @_scale_act_kernel(%arg0: i32, %arg1: memref<1xf32, #tpu.memory_space<smem>>, %arg2: memref<8x32xf32, #tpu.memory_space<vmem>>, %arg3: memref<8x32xf32, #tpu.memory_space<vmem>>) attributes {dimension_semantics = [#tpu.dimension_semantics<parallel>], iteration_bounds = array<i64: 1>, scalar_prefetch = 0 : i64, scratch_operands = 0 : i64, tpu.core_type = #tpu.core_type<tc>, window_params = [{transform_indices = @transform_0, window_bounds = array<i64: 1>}, {transform_indices = @transform_1, window_bounds = array<i64: 8, 32>}, {transform_indices = @transform_2, window_bounds = array<i64: 8, 32>}]} {
    %c0 = arith.constant 0 : index
    %0 = memref.load %arg1[%c0] : memref<1xf32, #tpu.memory_space<smem>>
    %c0_0 = arith.constant 0 : index
    %c0_1 = arith.constant 0 : index
    %1 = vector.load %arg2[%c0_0, %c0_1] : memref<8x32xf32, #tpu.memory_space<vmem>>, vector<8x32xf32>
    %2 = vector.broadcast %0 : f32 to vector<8x32xf32>
    %3 = arith.mulf %2, %1 : vector<8x32xf32>
    %cst = arith.constant 0.000000e+00 : f32
    %4 = vector.broadcast %cst : f32 to vector<8x32xf32>
    %5 = arith.maximumf %3, %4 : vector<8x32xf32>
    %c0_2 = arith.constant 0 : index
    %c0_3 = arith.constant 0 : index
    %6 = vector.load %arg3[%c0_2, %c0_3] : memref<8x32xf32, #tpu.memory_space<vmem>>, vector<8x32xf32>
    tpu.vector_store %arg3[%c0_2, %c0_3], %5 {strides = array<i32>} : memref<8x32xf32, #tpu.memory_space<vmem>>, vector<8x32xf32>,
    return
  }
  func.func @transform_0(%arg0: i32) -> i32 {
    %c0_i32 = arith.constant 0 : i32
    %c0_i32_0 = arith.constant 0 : i32
    return %c0_i32 : i32
  }
  func.func @transform_1(%arg0: i32) -> (i32, i32) {
    %c0_i32 = arith.constant 0 : i32
    %c0_i32_0 = arith.constant 0 : i32
    return %arg0, %c0_i32 : i32, i32
  }
  func.func @transform_2(%arg0: i32) -> (i32, i32) {
    %c0_i32 = arith.constant 0 : i32
    %c0_i32_0 = arith.constant 0 : i32
    return %arg0, %c0_i32 : i32, i32
  }
}

</mosaic_0001>

<llo_original>
// kernel: tpu_custom_call.1
$region0: #{tpu_custom_call.1}
  #allocation0 [shape = 'u32[]', space=smem, size = 0x4, offset = 0x4, fixed_abs, tag = 'smem constant byte address 0x4 - core index']
  #allocation1 [shape = 'u32[144,128]{1,0:T(1,128)}', space=vmem, size = 0x12000, scoped, tag = 'internal scratch']
  #allocation2 [shape = 'f32[1]{0:T(128)S(6)}', space=smem, size = 0x200, scoped, tag = 'scoped memory for tpu_custom_call.1']
  %s0 = inlined_call_operand.<no memory space> [shape: f32[1], index: 0, kind: input, shape index: {}]
  %s1 = inlined_call_operand.hbm [shape: f32[8,32], index: 1, kind: input, shape index: {}]
  %s2 = inlined_call_operand.hbm [shape: f32[8,32], index: 2, kind: output, shape index: {}]
  %s3 = sld [smem:[#allocation0]]
  $region22: #{tpu_custom_call.1} parent=0
    _
  %s5 = ssub.s32 1, %s3
  %s6 = scalar_select 0, %s5, %s3
  %7 = sst [smem:[#allocation2]] %s0
  $region1: #{tpu_custom_call.1} parent=0
    #allocation3 [shape = 'u8[4096]{0}', space=vmem, size = 0x1000, scoped, tag = 'input window, operand 1, single buffered']
    #allocation4 [shape = 's32[1]{0}', space=sflag, size = 0x4, scoped, tag = 'scoped memory for tpu_custom_call.1']
    #allocation5 [shape = 's32[1]{0}', space=sflag, size = 0x4, scoped, tag = 'scoped memory for tpu_custom_call.1']
    #allocation6 [shape = 'u8[4096]{0}', space=vmem, size = 0x1000, scoped, tag = 'output window, operand 0, single buffered']
    %8 = vsyncpa [#allocation4], 0
    %9 = vsyncpa [#allocation5], 0
    // Predicated region
    $region2: #{tpu_custom_call.1} parent=1 // pred_check
      _
    $region3: #{tpu_custom_call.1} parent=1 // pred_check_branch
      %11 = sbr.rel (0) target = $region5
    $region4: #{tpu_custom_call.1} parent=1 // pred_region
      _
    $region5: #{tpu_custom_call.1} parent=1 // pred_fallthru
      _
    // Predicated region
    $region6: #{tpu_custom_call.1} parent=1 // pred_check
      _
    $region7: #{tpu_custom_call.1} parent=1 // pred_check_branch
      %13 = sbr.rel (0) target = $region9
    $region8: #{tpu_custom_call.1} parent=1 // pred_region
      %s15 = ssub.s32 128, 128
      %16 = vsyncadd [#allocation4], %s15
      %s18 = sshll.u32 [#allocation3], 4
      %s19 = int_to_ptr.vmem [resolvable:$true] %s18
      %21 = dma.hbm_to_vmem [thread:$0]  %s1, 128, %s19, [#allocation4]
    $region9: #{tpu_custom_call.1} parent=1 // pred_fallthru
      _
    // Predicated region
    $region10: #{tpu_custom_call.1} parent=1 // pred_check
      _
    $region11: #{tpu_custom_call.1} parent=1 // pred_check_branch
      %23 = sbr.rel (0) target = $region13
    $region12: #{tpu_custom_call.1} parent=1 // pred_region
      %24 = dma.done [#allocation4], 128
    $region13: #{tpu_custom_call.1} parent=1 // pred_fallthru
      _
    %s25 = sld [smem:[#allocation2]]
    %v26 = vld [vmem:[#allocation3] sm:$0xff]
    %v27 = vstv %s25
    %v28 = vmul.f32 %v27, %v26
    %v29 = vmax.f32 %v28, 0.0
    %vm30 = vcmask 261120
    %31 = vst.msk [vmem:[#allocation6] sm:$0xff] %vm30, %v29
    // Predicated region
    $region14: #{tpu_custom_call.1} parent=1 // pred_check
      _
    $region15: #{tpu_custom_call.1} parent=1 // pred_check_branch
      %33 = sbr.rel (0) target = $region17
    $region16: #{tpu_custom_call.1} parent=1 // pred_region
      %s35 = ssub.s32 128, 128
      %36 = vsyncadd [#allocation5], %s35
      %s38 = sshll.u32 [#allocation6], 4
      %s39 = int_to_ptr.vmem [resolvable:$true] %s38
      %41 = dma.vmem_to_hbm [thread:$0]  %s39, 128, %s2, [#allocation5]
    $region17: #{tpu_custom_call.1} parent=1 // pred_fallthru
      _
    // Predicated region
    $region18: #{tpu_custom_call.1} parent=1 // pred_check
      _
    $region19: #{tpu_custom_call.1} parent=1 // pred_check_branch
      %43 = sbr.rel (0) target = $region21
    $region20: #{tpu_custom_call.1} parent=1 // pred_region
      %44 = dma.done [#allocation5], 128
    $region21: #{tpu_custom_call.1} parent=1 // pred_fallthru
      _
    %45 = vsyncpa [#allocation4], 1
    %46 = vsyncpa [#allocation5], 1

</llo_original>
